<compile_context>
chip_gen: v7x
topology: tpu7x:2x2x1
jax: 0.10.0
libtpu: 0.0.40
codegen_flags: <defaults>
</compile_context>

<pallas_src>
import math
import functools

import jax
import jax.numpy as jnp
from jax import lax
from jax.experimental import pallas as pl
from jax.experimental.pallas import tpu as pltpu

_MASK_NEG = -1.0e30        # finite "minus infinity" for the additive mask bias
_MASK_THRESH = -1.0e20     # anything below this is a masked position
_VMEM_LIMIT = 48 * 1024 * 1024


# ------------------------------ tiling helpers -------------------------------
def _pick_tile(total, target, align):
    """Largest multiple of `align` <= target that divides `total`; else full dim."""
    if total <= target:
        return total
    t = (target // align) * align
    while t >= align:
        if total % t == 0:
            return t
        t -= align
    return total


def _pick_head_block(h, h_kv, d_k):
    """Smallest kv-head block whose q and kv lane widths are 128-aligned (or full)."""
    n_rep = h // h_kv
    for m in range(1, h_kv + 1):
        if h_kv % m:
            continue
        q_lanes = m * n_rep * d_k
        kv_lanes = m * d_k
        q_ok = (q_lanes % 128 == 0) or (m * n_rep == h)
        kv_ok = (kv_lanes % 128 == 0) or (m == h_kv)
        if q_ok and kv_ok:
            return m
    return h_kv


# ----------------------------- linear kernel ---------------------------------
def _linear_kernel(x_ref, w_ref, b_ref, o_ref, *, compute_dtype):
    x = x_ref[0].astype(compute_dtype)                      # (tt, Fin)
    w = w_ref[...].astype(compute_dtype)                    # (Fin, tn)
    y = jnp.dot(x, w, preferred_element_type=jnp.float32)   # f32 accumulation
    o_ref[0] = (y + b_ref[...]).astype(o_ref.dtype)         # bias add in f32


def linear(x, w, b, *, compute_dtype=jnp.float32, tile_t=512, tile_n=256):
    """x: (B, T, Fin), w: (Fin, Fout), b: (Fout,) -> (B, T, Fout)."""
    B, T, Fin = x.shape
    Fout = w.shape[1]
    tt = _pick_tile(T, tile_t, 8)       # rows per step (8-aligned or full)
    tn = _pick_tile(Fout, tile_n, 128)  # output lanes per step (128-aligned or full)
    grid = (B, T // tt, Fout // tn)
    return pl.pallas_call(
        functools.partial(_linear_kernel, compute_dtype=compute_dtype),
        out_shape=jax.ShapeDtypeStruct((B, T, Fout), x.dtype),
        grid=grid,
        in_specs=[
            pl.BlockSpec((1, tt, Fin), lambda b, t, n: (b, t, 0)),
            pl.BlockSpec((Fin, tn), lambda b, t, n: (0, n)),
            pl.BlockSpec((1, tn), lambda b, t, n: (0, n)),
        ],
        out_specs=pl.BlockSpec((1, tt, tn), lambda b, t, n: (b, t, n)),
        compiler_params=pltpu.CompilerParams(
            dimension_semantics=("parallel", "parallel", "parallel"),
            vmem_limit_bytes=_VMEM_LIMIT),
    )(x, w, b.reshape(1, Fout))


# --------------------------- attention core kernel ---------------------------
def _attn_kernel(*refs, n_rep, hkv_blk, dk, scale, use_mask,
                 compute_dtype, approx_recip):
    if use_mask:
        q_ref, k_ref, v_ref, bias_ref, o_ref = refs
    else:
        q_ref, k_ref, v_ref, o_ref = refs
    T1 = q_ref.shape[1]

    # fold 1/sqrt(dk) into q (scale the small tensor, in f32, before MXU cast)
    q = (q_ref[0].astype(jnp.float32) * scale).astype(compute_dtype)  # (T1, Hb*Dk)
    k = k_ref[0].astype(compute_dtype)                                # (T2, Hkvb*Dk)
    v = v_ref[0].astype(compute_dtype)

    bias_rep = None
    if use_mask:
        bias_rep = bias_ref[0]                              # (Tm, T2), Tm in {1, T1}
        if n_rep > 1 and bias_rep.shape[0] != 1:
            # q rows of one kv group are stacked (rep, t); replicate the bias to match
            bias_rep = jnp.tile(bias_rep, (n_rep, 1))       # (n_rep*T1, T2)

    outs = []
    for g in range(hkv_blk):                                # one MXU pass per kv head
        kg = k[:, g * dk:(g + 1) * dk]                      # (T2, Dk)
        vg = v[:, g * dk:(g + 1) * dk]                      # (T2, Dk)
        q_heads = [q[:, (g * n_rep + r) * dk:(g * n_rep + r + 1) * dk]
                   for r in range(n_rep)]                   # n_rep x (T1, Dk)
        qg = q_heads[0] if n_rep == 1 else jnp.concatenate(q_heads, axis=0)

        # scores: contract Dk directly (no materialized K^T), f32 accumulation
        s = lax.dot_general(qg, kg, (((1,), (1,)), ((), ())),
                            preferred_element_type=jnp.float32)       # (n_rep*T1, T2)
        if use_mask:
            s = s + bias_rep                                # additive mask bias

        # stable softmax in f32; masked columns underflow to exactly 0
        m = jnp.max(s, axis=-1, keepdims=True)
        p = jnp.exp(s - m)
        l = jnp.sum(p, axis=-1, keepdims=True)              # >= 1 always (exp(0) term)
        attn = p * pl.reciprocal(l, approx=approx_recip)
        if use_mask:
            # exact torch semantics: fully-masked rows -> all-zero attention (no NaN)
            attn = jnp.where(bias_rep < _MASK_THRESH, 0.0, attn)

        ctx = jnp.dot(attn.astype(compute_dtype), vg,
                      preferred_element_type=jnp.float32)   # (n_rep*T1, Dk)
        for r in range(n_rep):
            outs.append(ctx[r * T1:(r + 1) * T1, :])        # head h = g*n_rep + r

    # single lane-dense store of the whole head block
    o_ref[0] = jnp.concatenate(outs, axis=-1).astype(o_ref.dtype)     # (T1, Hb*Dk)


def attention_core(q, k, v, mask, h, h_kv, d_k, *, compute_dtype=jnp.float32):
    """q: (B,T1,h*d_k), k/v: (B,T2,h_kv*d_k) slabs, mask: (B,1,T2)/(B,T1,T2)/None."""
    B, T1, _ = q.shape
    T2 = k.shape[1]
    n_rep = h // h_kv
    hkv_blk = _pick_head_block(h, h_kv, d_k)
    h_blk = hkv_blk * n_rep
    n_blocks = h_kv // hkv_blk
    scale = 1.0 / math.sqrt(d_k)
    use_mask = mask is not None and mask.shape[-1] > 0
    approx = compute_dtype == jnp.bfloat16

    kernel = functools.partial(
        _attn_kernel, n_rep=n_rep, hkv_blk=hkv_blk, dk=d_k, scale=scale,
        use_mask=use_mask, compute_dtype=compute_dtype, approx_recip=approx)

    in_specs = [
        pl.BlockSpec((1, T1, h_blk * d_k), lambda b, hb: (b, 0, hb)),
        pl.BlockSpec((1, T2, hkv_blk * d_k), lambda b, hb: (b, 0, hb)),
        pl.BlockSpec((1, T2, hkv_blk * d_k), lambda b, hb: (b, 0, hb)),
    ]
    args = [q, k, v]
    if use_mask:
        mask = mask[..., :T2]                               # mirror wenet truncation
        Tm = mask.shape[1]
        if Tm not in (1, T1):
            raise ValueError(f"mask time1 dim must be 1 or {T1}, got {Tm}")
        bias = jnp.where(mask == 0, jnp.float32(_MASK_NEG), jnp.float32(0.0))
        in_specs.append(pl.BlockSpec((1, Tm, T2), lambda b, hb: (b, 0, 0)))
        args.append(bias)

    return pl.pallas_call(
        kernel,
        out_shape=jax.ShapeDtypeStruct((B, T1, h * d_k), q.dtype),
        grid=(B, n_blocks),
        in_specs=in_specs,
        out_specs=pl.BlockSpec((1, T1, h_blk * d_k), lambda b, hb: (b, 0, hb)),
        compiler_params=pltpu.CompilerParams(
            dimension_semantics=("parallel", "parallel"),
            vmem_limit_bytes=_VMEM_LIMIT),
    )(*args)


# ------------------------------ module wrapper --------------------------------
class MultiHeadedCrossAttention:
    def __init__(self, n_head, n_feat, dropout_rate=0.0, n_kv_head=None,
                 head_dim=None, *, key, compute_dtype=jnp.float32):
        self.inner_dim = n_feat if head_dim is None else head_dim * n_head
        if n_kv_head is not None:
            assert head_dim is not None
            self.inner_kv_dim = head_dim * n_kv_head
        else:
            self.inner_kv_dim = self.inner_dim
            n_kv_head = n_head
        self.d_k = self.inner_dim // n_head
        assert self.d_k == self.inner_kv_dim // n_kv_head
        self.h = n_head
        self.h_kv = n_kv_head
        self.dropout_rate = dropout_rate
        self.compute_dtype = compute_dtype

        keys = jax.random.split(key, 8)

        def init_linear(kw, kb, fin, fout):
            bound = 1.0 / math.sqrt(fin)                    # torch.nn.Linear default init
            w = jax.random.uniform(kw, (fin, fout), jnp.float32, -bound, bound)
            b = jax.random.uniform(kb, (fout,), jnp.float32, -bound, bound)
            return w, b

        self.wq, self.bq = init_linear(keys[0], keys[1], n_feat, self.inner_dim)
        self.wk, self.bk = init_linear(keys[2], keys[3], n_feat, self.inner_kv_dim)
        self.wv, self.bv = init_linear(keys[4], keys[5], n_feat, self.inner_kv_dim)
        self.wo, self.bo = init_linear(keys[6], keys[7], self.inner_dim, n_feat)

    def __call__(self, query, key, value, mask=None, cache=None):
        """query: (B,T1,F); key/value: (B,T2,F); cache: (k_slab, v_slab) or None."""
        cdt = self.compute_dtype
        q = linear(query, self.wq, self.bq, compute_dtype=cdt)     # (B,T1,h*d_k)
        if cache is not None and cache[0].shape[0] > 0:
            # cache holds projected K/V in slab layout (B, T2, h_kv*d_k)
            k, v = cache
        else:
            k = linear(key, self.wk, self.bk, compute_dtype=cdt)   # (B,T2,h_kv*d_k)
            v = linear(value, self.wv, self.bv, compute_dtype=cdt)
        new_cache = (k, v)
        ctx = attention_core(q, k, v, mask, self.h, self.h_kv, self.d_k,
                             compute_dtype=cdt)                    # (B,T1,h*d_k)
        out = linear(ctx, self.wo, self.bo, compute_dtype=cdt)     # (B,T1,n_feat)
        return out, new_cache


# -------------------------------- reference -----------------------------------
def reference_forward(m, query, key, value, mask=None):
    B, T1, _ = query.shape
    T2 = key.shape[1]
    q = (query @ m.wq + m.bq).reshape(B, T1, m.h, m.d_k).transpose(0, 2, 1, 3)
    k = (key @ m.wk + m.bk).reshape(B, T2, m.h_kv, m.d_k).transpose(0, 2, 1, 3)
    v = (value @ m.wv + m.bv).reshape(B, T2, m.h_kv, m.d_k).transpose(0, 2, 1, 3)
    if m.h_kv != m.h:
        k = jnp.repeat(k, m.h // m.h_kv, axis=1)
        v = jnp.repeat(v, m.h // m.h_kv, axis=1)
    scores = jnp.einsum("bhqd,bhkd->bhqk", q, k) / math.sqrt(m.d_k)
    if mask is not None and mask.shape[-1] > 0:
        inv = (mask[:, None, :, :] == 0)
        scores = jnp.where(inv, -jnp.inf, scores)
        attn = jax.nn.softmax(scores, axis=-1)
        attn = jnp.where(inv, 0.0, attn)
    else:
        attn = jax.nn.softmax(scores, axis=-1)
    x = jnp.einsum("bhqk,bhkd->bhqd", attn, v)
    x = x.transpose(0, 2, 1, 3).reshape(B, T1, m.h * m.d_k)
    return x @ m.wo + m.bo


# ---------------------------------- main ---------------------------------------
if __name__ == "__main__":
    B, T1, T2, n_feat, n_head = 2, 8, 16, 32, 4

    root = jax.random.PRNGKey(0)
    k_param, k_param2, k_q, k_k, k_v = jax.random.split(root, 5)

    query = jax.random.normal(k_q, (B, T1, n_feat), jnp.float32)
    key_x = jax.random.normal(k_k, (B, T2, n_feat), jnp.float32)
    value = jax.random.normal(k_v, (B, T2, n_feat), jnp.float32)

    # ---- test 1: MHA, (B,1,T2) padding mask, f32 MXU, tight tolerance ----
    mha = MultiHeadedCrossAttention(n_head, n_feat, dropout_rate=0.0, key=k_param)
    mask = jnp.ones((B, 1, T2), dtype=jnp.int32)
    mask = mask.at[1, 0, T2 - 4:].set(0)

    out, (k_cache, v_cache) = mha(query, key_x, value, mask=mask)
    out = jax.block_until_ready(out)
    ref = reference_forward(mha, query, key_x, value, mask)
    assert out.shape == (B, T1, n_feat)
    assert k_cache.shape == (B, T2, n_head * mha.d_k)
    assert jnp.allclose(out, ref, rtol=1e-4, atol=1e-4), "MHA mismatch vs reference"

    # cached decode step reuses the projected K/V slabs
    out_c, _ = mha(query, key_x, value, mask=mask, cache=(k_cache, v_cache))
    out_c = jax.block_until_ready(out_c)
    assert jnp.allclose(out_c, ref, rtol=1e-4, atol=1e-4), "cache path mismatch"

    # ---- test 2: GQA (n_kv_head=2), (B,T1,T2) mask incl. fully-masked rows ----
    gqa = MultiHeadedCrossAttention(n_head, n_feat, dropout_rate=0.0,
                                    n_kv_head=2, head_dim=8, key=k_param2)
    mask2 = jnp.ones((B, T1, T2), dtype=jnp.int32)
    mask2 = mask2.at[0, :, :3].set(0)
    mask2 = mask2.at[1, T1 - 2:, :].set(0)          # fully-masked query rows -> zeros
    out2, _ = gqa(query, key_x, value, mask=mask2)
    out2 = jax.block_until_ready(out2)
    ref2 = reference_forward(gqa, query, key_x, value, mask2)
    assert jnp.allclose(out2, ref2, rtol=1e-4, atol=1e-4), "GQA mismatch vs reference"

    # no-mask path uses the kernel variant without the bias input
    out3, _ = gqa(query, key_x, value, mask=None)
    out3 = jax.block_until_ready(out3)
    ref3 = reference_forward(gqa, query, key_x, value, None)
    assert jnp.allclose(out3, ref3, rtol=1e-4, atol=1e-4), "no-mask mismatch"

    # ---- test 3: bf16 MXU operands (f32 accumulation / softmax), loose tol ----
    mha_bf16 = MultiHeadedCrossAttention(n_head, n_feat, dropout_rate=0.0,
                                         key=k_param, compute_dtype=jnp.bfloat16)
    out4, _ = mha_bf16(query, key_x, value, mask=mask)
    out4 = jax.block_until_ready(out4)
    assert jnp.allclose(out4, ref, rtol=1e-1, atol=1e-1), "bf16 path mismatch"

    print("KERNEL_OK")
</pallas_src>

<mosaic_0001>
module attributes {stable_mosaic.version = 11 : i64} {
  func.func @_linear_kernel(%arg0: i32, %arg1: i32, %arg2: i32, %arg3: memref<1x8x32xf32, #tpu.memory_space<vmem>>, %arg4: memref<32x32xf32, #tpu.memory_space<vmem>>, %arg5: memref<1x32xf32, #tpu.memory_space<vmem>>, %arg6: memref<1x8x32xf32, #tpu.memory_space<vmem>>) attributes {dimension_semantics = [#tpu.dimension_semantics<parallel>, #tpu.dimension_semantics<parallel>, #tpu.dimension_semantics<parallel>], iteration_bounds = array<i64: 2, 1, 1>, scalar_prefetch = 0 : i64, scratch_operands = 0 : i64, tpu.core_type = #tpu.core_type<tc>, window_params = [{transform_indices = @transform_0, window_bounds = array<i64: 1, 8, 32>}, {transform_indices = @transform_1, window_bounds = array<i64: 32, 32>}, {transform_indices = @transform_2, window_bounds = array<i64: 1, 32>}, {transform_indices = @transform_3, window_bounds = array<i64: 1, 8, 32>}]} {
    %c0 = arith.constant 0 : index
    %c0_0 = arith.constant 0 : index
    %c0_1 = arith.constant 0 : index
    %0 = vector.load %arg3[%c0, %c0_0, %c0_1] : memref<1x8x32xf32, #tpu.memory_space<vmem>>, vector<1x8x32xf32>
    %1 = vector.shape_cast %0 : vector<1x8x32xf32> to vector<8x32xf32>
    %c0_2 = arith.constant 0 : index
    %c0_3 = arith.constant 0 : index
    %2 = vector.load %arg4[%c0_2, %c0_3] : memref<32x32xf32, #tpu.memory_space<vmem>>, vector<32x32xf32>
    %cst = arith.constant dense<0.000000e+00> : vector<8x32xf32>
    %3 = tpu.matmul %1, %2, %cst {dimension_numbers = #tpu.dot_dimension_numbers<[1], [0], [0], [1], [0, 0, 1, 1], [], []>} : vector<8x32xf32>, vector<32x32xf32>, vector<8x32xf32> -> vector<8x32xf32>
    %c0_4 = arith.constant 0 : index
    %c0_5 = arith.constant 0 : index
    %4 = vector.load %arg5[%c0_4, %c0_5] : memref<1x32xf32, #tpu.memory_space<vmem>>, vector<1x32xf32>
    %5 = vector.broadcast %4 : vector<1x32xf32> to vector<8x32xf32>
    %6 = arith.addf %3, %5 : vector<8x32xf32>
    %c0_6 = arith.constant 0 : index
    %c0_7 = arith.constant 0 : index
    %c0_8 = arith.constant 0 : index
    %7 = vector.load %arg6[%c0_6, %c0_7, %c0_8] : memref<1x8x32xf32, #tpu.memory_space<vmem>>, vector<1x8x32xf32>
    %8 = vector.shape_cast %7 : vector<1x8x32xf32> to vector<8x32xf32>
    %9 = vector.shape_cast %6 : vector<8x32xf32> to vector<1x8x32xf32>
    tpu.vector_store %arg6[%c0_6, %c0_7, %c0_8], %9 {strides = array<i32>} : memref<1x8x32xf32, #tpu.memory_space<vmem>>, vector<1x8x32xf32>,
    return
  }
  func.func @transform_0(%arg0: i32, %arg1: i32, %arg2: i32) -> (i32, i32, i32) {
    %c0_i32 = arith.constant 0 : i32
    %c0_i32_0 = arith.constant 0 : i32
    return %arg0, %arg1, %c0_i32 : i32, i32, i32
  }
  func.func @transform_1(%arg0: i32, %arg1: i32, %arg2: i32) -> (i32, i32) {
    %c0_i32 = arith.constant 0 : i32
    %c0_i32_0 = arith.constant 0 : i32
    return %c0_i32, %arg2 : i32, i32
  }
  func.func @transform_2(%arg0: i32, %arg1: i32, %arg2: i32) -> (i32, i32) {
    %c0_i32 = arith.constant 0 : i32
    %c0_i32_0 = arith.constant 0 : i32
    return %c0_i32, %arg2 : i32, i32
  }
  func.func @transform_3(%arg0: i32, %arg1: i32, %arg2: i32) -> (i32, i32, i32) {
    %c0_i32 = arith.constant 0 : i32
    return %arg0, %arg1, %arg2 : i32, i32, i32
  }
}

</mosaic_0001>

<llo_original>
// kernel: tpu_custom_call.1
$region0: #{tpu_custom_call.1}
  #allocation0 [shape = 'u32[]', space=smem, size = 0x4, offset = 0x4, fixed_abs, tag = 'smem constant byte address 0x4 - core index']
  #allocation1 [shape = 'u32[144,128]{1,0:T(1,128)}', space=vmem, size = 0x12000, scoped, tag = 'internal scratch']
  %s0 = inlined_call_operand.hbm [shape: f32[2,8,32], index: 0, kind: input, shape index: {}]
  %s1 = inlined_call_operand.hbm [shape: f32[32,32], index: 1, kind: input, shape index: {}]
  %s2 = inlined_call_operand.vmem [shape: f32[1,32], index: 2, kind: input, shape index: {}]
  %s3 = inlined_call_operand.hbm [shape: f32[2,8,32], index: 3, kind: output, shape index: {}]
  %s4 = sld [smem:[#allocation0]]
  $region53: #{tpu_custom_call.1} parent=0
    _
  %s6 = ssub.s32 1, %s4
  %s7 = scalar_select 0, %s6, %s4
  $region1: #{tpu_custom_call.1} parent=0
    #allocation2 [shape = 'u8[8192]{0}', space=vmem, size = 0x2000, scoped, tag = 'input window, operand 0']
    #allocation3 [shape = 's32[2]{0}', space=sflag, size = 0x8, scoped, tag = 'scoped memory for tpu_custom_call.1']
    #allocation4 [shape = 's32[2]{0}', space=sflag, size = 0x8, scoped, tag = 'scoped memory for tpu_custom_call.1']
    #allocation5 [shape = 'u8[16384]{0}', space=vmem, size = 0x4000, scoped, tag = 'input window, operand 1, single buffered']
    #allocation6 [shape = 's32[1]{0}', space=sflag, size = 0x4, scoped, tag = 'scoped memory for tpu_custom_call.1']
    #allocation7 [shape = 'u8[8192]{0}', space=vmem, size = 0x2000, scoped, tag = 'output window, operand 0']
    %8 = vsyncpa [#allocation3], 0
    %s9 = scalar_lea.sflag [#allocation3], 1
    %10 = vsyncpa %s9, 0
    %11 = vsyncpa [#allocation6], 0
    %12 = vsyncpa [#allocation4], 0
    %s13 = scalar_lea.sflag [#allocation4], 1
    %14 = vsyncpa %s13, 0
    loop: start=0, step=1, limit=4
    $region2: #{tpu_custom_call.1} parent=1 // loop_pre_header
      _
    $region3: #{tpu_custom_call.1} parent=1 // loop_header
      %s16 = sphi 0, %s20
      %p17 = scmp.ge.s32.totalorder %s16, 4
      %s23 = sphi 0, %s42
      %s24 = sphi 0, %s38
      %s25 = sphi 0, %s34
      %s26 = sphi 0, %s23
      %s27 = sphi 0, %s24
      %s28 = sphi 0, %s25
      %s29 = sphi 0, %s26
      %s30 = sphi 0, %s27
      %s31 = sphi 0, %s28
      %s47 = sphi 0, %s49
      %s50 = sphi 0, %s47
      %s51 = sphi 0, %s50
      %s67 = sphi 0, %s51
      %s73 = sphi 0, %s75
      %s76 = sphi 0, %s73
      %s77 = sphi 0, %s76
      %s93 = sphi 0, %s77
      %s99 = sphi 0, %s101
      %s102 = sphi 0, %s99
      %s103 = sphi 0, %s102
      %s119 = sphi 0, %s103
      %s129 = sphi 0, %s131
      %s132 = sphi 0, %s129
      %s133 = sphi 0, %s132
      %s149 = sphi 0, %s133
    $region4: #{tpu_custom_call.1} parent=1 // loop_header_branch
      %19 = sbr.rel (%p17) target = $region8
    $region5: #{tpu_custom_call.1} parent=1 // loop_body
      %s21 = ssub.s32 %s16, 1
      %s22 = ssub.s32 %s16, 2
      %s32 = sadd.s32 1, %s25
      %p33 = scmp.ge.s32.totalorder %s32, 1
      %s34 = scalar_select %p33, 0, %s32
      %s35 = sadd.s32 1, %s24
      %s36 = scalar_select %p33, %s35, %s24
      %p37 = scmp.ge.s32.totalorder %s36, 1
      %s38 = scalar_select %p37, 0, %s36
      %s39 = sadd.s32 1, %s23
      %s40 = scalar_select %p37, %s39, %s23
      %p41 = scmp.ge.s32.totalorder %s40, 2
      %s42 = scalar_select %p41, 0, %s40
      %s43 = ssub.s32 %s23, %s42
      %s44 = ssub.s32 %s24, %s38
      %s45 = sor.u32 %s43, %s44
      %p46 = scmp.eq.s32.totalorder %s45, 0
      %s48 = sadd.s32 %s47, 1
      %s49 = scalar_select %p46, %s47, %s48
      %p52 = pneg %p46
      %p53 = scmp.eq.s32.totalorder %s16, 1
      %p54 = por %p52, %p53
      %p55 = scmp.ne.s32.totalorder %s47, %s50
      %p56 = scmp.eq.s32.totalorder %s16, 0
      %p57 = por %p55, %p56
      %p58 = scmp.ne.s32.totalorder %s47, %s50
      %p59 = scmp.eq.s32.totalorder %s21, 1
      %p60 = por %p58, %p59
      %p61 = scmp.ne.s32.totalorder %s50, %s51
      %p62 = scmp.eq.s32.totalorder %s21, 0
      %p63 = por %p61, %p62
      %p64 = scmp.ne.s32.totalorder %s50, %s51
      %p65 = scmp.eq.s32.totalorder %s22, 1
      %p66 = por %p64, %p65
      %p68 = scmp.ne.s32.totalorder %s51, %s67
      %p69 = scmp.eq.s32.totalorder %s22, 0
      %p70 = por %p68, %p69
      %s71 = ssub.s32 %s25, %s34
      %p72 = scmp.eq.s32.totalorder %s71, 0
      %s74 = sadd.s32 %s73, 1
      %s75 = scalar_select %p72, %s73, %s74
      %p78 = pneg %p72
      %p79 = scmp.eq.s32.totalorder %s16, 1
      %p80 = por %p78, %p79
      %p81 = scmp.ne.s32.totalorder %s73, %s76
      %p82 = scmp.eq.s32.totalorder %s16, 0
      %p83 = por %p81, %p82
      %p84 = scmp.ne.s32.totalorder %s73, %s76
      %p85 = scmp.eq.s32.totalorder %s21, 1
      %p86 = por %p84, %p85
      %p87 = scmp.ne.s32.totalorder %s76, %s77
      %p88 = scmp.eq.s32.totalorder %s21, 0
      %p89 = por %p87, %p88
      %p90 = scmp.ne.s32.totalorder %s76, %s77
      %p91 = scmp.eq.s32.totalorder %s22, 1
      %p92 = por %p90, %p91
      %p94 = scmp.ne.s32.totalorder %s77, %s93
      %p95 = scmp.eq.s32.totalorder %s22, 0
      %p96 = por %p94, %p95
      %s97 = ssub.s32 %s25, %s34
      %p98 = scmp.eq.s32.totalorder %s97, 0
      %s100 = sadd.s32 %s99, 1
      %s101 = scalar_select %p98, %s99, %s100
      %p104 = pneg %p98
      %p105 = scmp.eq.s32.totalorder %s16, 1
      %p106 = por %p104, %p105
      %p107 = scmp.ne.s32.totalorder %s99, %s102
      %p108 = scmp.eq.s32.totalorder %s16, 0
      %p109 = por %p107, %p108
      %p110 = scmp.ne.s32.totalorder %s99, %s102
      %p111 = scmp.eq.s32.totalorder %s21, 1
      %p112 = por %p110, %p111
      %p113 = scmp.ne.s32.totalorder %s102, %s103
      %p114 = scmp.eq.s32.totalorder %s21, 0
      %p115 = por %p113, %p114
      %p116 = scmp.ne.s32.totalorder %s102, %s103
      %p117 = scmp.eq.s32.totalorder %s22, 1
      %p118 = por %p116, %p117
      %p120 = scmp.ne.s32.totalorder %s103, %s119
      %p121 = scmp.eq.s32.totalorder %s22, 0
      %p122 = por %p120, %p121
      %s123 = ssub.s32 %s23, %s42
      %s124 = ssub.s32 %s24, %s38
      %s125 = sor.u32 %s123, %s124
      %s126 = ssub.s32 %s25, %s34
      %s127 = sor.u32 %s125, %s126
      %p128 = scmp.eq.s32.totalorder %s127, 0
      %s130 = sadd.s32 %s129, 1
      %s131 = scalar_select %p128, %s129, %s130
      %p134 = pneg %p128
      %p135 = scmp.eq.s32.totalorder %s16, 1
      %p136 = por %p134, %p135
      %p137 = scmp.ne.s32.totalorder %s129, %s132
      %p138 = scmp.eq.s32.totalorder %s16, 0
      %p139 = por %p137, %p138
      %p140 = scmp.ne.s32.totalorder %s129, %s132
      %p141 = scmp.eq.s32.totalorder %s21, 1
      %p142 = por %p140, %p141
      %p143 = scmp.ne.s32.totalorder %s132, %s133
      %p144 = scmp.eq.s32.totalorder %s21, 0
      %p145 = por %p143, %p144
      %p146 = scmp.ne.s32.totalorder %s132, %s133
      %p147 = scmp.eq.s32.totalorder %s22, 1
      %p148 = por %p146, %p147
      %p150 = scmp.ne.s32.totalorder %s133, %s149
      %p151 = scmp.eq.s32.totalorder %s22, 0
      %p152 = por %p150, %p151
      %p153 = scmp.le.s32.totalorder 1, %s16
      %p154 = scmp.lt.s32.totalorder %s16, 3
      %p155 = pnand %p153, %p154
      %p156 = pneg %p155
      // Predicated region
      $region9: #{tpu_custom_call.1} parent=5 // pred_check
        _
      $region10: #{tpu_custom_call.1} parent=5 // pred_check_branch
        %158 = sbr.rel (%p155) target = $region12
      $region11: #{tpu_custom_call.1} parent=5 // pred_region
        %s159 = ssub.s32 %s16, 1
        // Predicated region
        $region13: #{tpu_custom_call.1} parent=11 // pred_check
          %p160 = pneg %p89
        $region14: #{tpu_custom_call.1} parent=11 // pred_check_branch
          %162 = sbr.rel (%p160) target = $region16
        $region15: #{tpu_custom_call.1} parent=11 // pred_region
          %s164 = ssub.s32 512, 512
          %165 = vsyncadd [#allocation6], %s164
          %s166 = smul.addr %s28, 128
          %s167 = scalar_lea.hbm %s1, %s166
          %s168 = sshll.u32 [#allocation5], 4
          %s169 = int_to_ptr.vmem [resolvable:$true] %s168
          %174 = dma.hbm_to_vmem [thread:$0]  %s167, 512, %s169, [#allocation6], 128, 128, 8
        $region16: #{tpu_custom_call.1} parent=11 // pred_fallthru
          _
        // Predicated region
        $region17: #{tpu_custom_call.1} parent=11 // pred_check
          %p175 = pneg %p115
        $region18: #{tpu_custom_call.1} parent=11 // pred_check_branch
          %177 = sbr.rel (%p175) target = $region20
        $region19: #{tpu_custom_call.1} parent=11 // pred_region
          %p178 = scmp.lt.s32.totalorder %s28, 0
          %s179 = scalar_select %p178, %s28, 0
          %s180 = scalar_lea.vmem %s2, %s179
        $region20: #{tpu_custom_call.1} parent=11 // pred_fallthru
          _
      $region12: #{tpu_custom_call.1} parent=5 // pred_fallthru
        _
      %p181 = scmp.lt.s32.totalorder %s16, 2
      // Predicated region
      $region21: #{tpu_custom_call.1} parent=5 // pred_check
        %p182 = pneg %p181
      $region22: #{tpu_custom_call.1} parent=5 // pred_check_branch
        %184 = sbr.rel (%p182) target = $region24
      $region23: #{tpu_custom_call.1} parent=5 // pred_region
        // Predicated region
        $region25: #{tpu_custom_call.1} parent=23 // pred_check
          %p185 = pneg %p57
        $region26: #{tpu_custom_call.1} parent=23 // pred_check_branch
          %187 = sbr.rel (%p185) target = $region28
        $region27: #{tpu_custom_call.1} parent=23 // pred_region
          %s188 = sand.u32 %s47, 1
          %s189 = scalar_lea.sflag [#allocation3], %s188
          %s190 = sand.u32 %s47, 1
          %s191 = smul.addr %s190, 8
          %s192 = scalar_lea.vmem [#allocation2], %s191
          %s194 = ssub.s32 128, 128
          %195 = vsyncadd %s189, %s194
          %s196 = sadd.s32 %s24, %s23
          %s197 = smul.addr %s196, 128
          %s198 = scalar_lea.hbm %s0, %s197
          %s200 = sshll.u32 %s192, 4
          %s201 = int_to_ptr.vmem [resolvable:$true] %s200
          %203 = dma.hbm_to_vmem [thread:$0]  %s198, 128, %s201, %s189
        $region28: #{tpu_custom_call.1} parent=23 // pred_fallthru
          _
      $region24: #{tpu_custom_call.1} parent=5 // pred_fallthru
        _
      %p204 = scmp.le.s32.totalorder 1, %s16
      %p205 = scmp.lt.s32.totalorder %s16, 3
      %p206 = pnand %p204, %p205
      %p207 = pneg %p206
      // Predicated region
      $region29: #{tpu_custom_call.1} parent=5 // pred_check
        _
      $region30: #{tpu_custom_call.1} parent=5 // pred_check_branch
        %209 = sbr.rel (%p206) target = $region32
      $region31: #{tpu_custom_call.1} parent=5 // pred_region
        %s210 = ssub.s32 %s16, 1
        %s211 = sand.u32 %s50, 1
        %s212 = scalar_lea.sflag [#allocation3], %s211
        %s213 = sand.u32 %s50, 1
        %s214 = smul.addr %s213, 8
        %s215 = scalar_lea.vmem [#allocation2], %s214
        // Predicated region
        $region33: #{tpu_custom_call.1} parent=31 // pred_check
          %p216 = pneg %p63
        $region34: #{tpu_custom_call.1} parent=31 // pred_check_branch
          %218 = sbr.rel (%p216) target = $region36
        $region35: #{tpu_custom_call.1} parent=31 // pred_region
          %219 = dma.done %s212, 128
        $region36: #{tpu_custom_call.1} parent=31 // pred_fallthru
          _
        // Predicated region
        $region37: #{tpu_custom_call.1} parent=31 // pred_check
          %p220 = pneg %p89
        $region38: #{tpu_custom_call.1} parent=31 // pred_check_branch
          %222 = sbr.rel (%p220) target = $region40
        $region39: #{tpu_custom_call.1} parent=31 // pred_region
          %223 = dma.done [#allocation6], 512
        $region40: #{tpu_custom_call.1} parent=31 // pred_fallthru
          _
        %s224 = sand.u32 %s50, 1
        %s225 = scalar_lea.sflag [#allocation3], %s224
        %s226 = sand.u32 %s50, 1
        %s227 = smul.addr %s226, 8
        %s228 = scalar_lea.vmem [#allocation2], %s227
        %p229 = pneg %p63
        %p230 = pneg %p60
        %p231 = pneg %p89
        %p232 = pneg %p86
        %p233 = scmp.lt.s32.totalorder %s28, 0
        %s234 = scalar_select %p233, %s28, 0
        %s235 = scalar_lea.vmem %s2, %s234
        %p236 = pneg %p115
        %p237 = pneg %p112
        %p238 = pneg %p145
        %p239 = pneg %p142
        %s240 = sand.u32 %s132, 1
        %s241 = scalar_lea.sflag [#allocation4], %s240
        %s242 = sand.u32 %s132, 1
        %s243 = smul.addr %s242, 8
        %s244 = scalar_lea.vmem [#allocation7], %s243
        %p245 = scmp.lt.s32.totalorder %s28, 0
        %s246 = scalar_select %p245, %s28, 0
        %s247 = scalar_lea.vmem %s2, %s246
        %v248 = vld [vmem:[%s215] sm:$0xff]
        %v249 = vld [vmem:[#allocation5] sm:$0xff]
        %v250 = vld [vmem:[#allocation5 + $0x8] sm:$0xff]
        %v251 = vld [vmem:[#allocation5 + $0x10] sm:$0xff]
        %v252 = vld [vmem:[#allocation5 + $0x18] sm:$0xff]
        %v253 = vld [vmem:[%s247] sm:$0x1]
        %v255 = vlaneseq
        %v256 = vshrl.u32 %v255, 7
        %v257 = vsub.s32 0, %v256
        %v258 = vrot.slane %v253, %v257
        %vm260 = vcmask 261120
        %v262 = vsel %vm260, %v248, 0
        %264 = vmatprep.subr.mxu0 0.0
        %265 = vmatpush1.msra.mxu0 %v249
        %266 = vmatprep.subr.mxu0 0.0
        %267 = vmatpush1.msra.mxu0 %v250
        %268 = vmatprep.subr.mxu0 0.0
        %269 = vmatpush1.msra.mxu0 %v251
        %270 = vmatprep.subr.mxu0 0.0
        %271 = vmatpush1.msra.mxu0 %v252
        %272 = vmatprep.subr.mxu0 0.0
        %273 = vmatpush1.msra.mxu0 0.0
        %274 = vmatprep.subr.mxu0 0.0
        %275 = vmatpush1.msra.mxu0 0.0
        %276 = vmatprep.subr.mxu0 0.0
        %277 = vmatpush1.msra.mxu0 0.0
        %278 = vmatprep.subr.mxu0 0.0
        %279 = vmatpush1.msra.mxu0 0.0
        %280 = vmatprep.subr.mxu0 0.0
        %281 = vmatpush1.msra.mxu0 0.0
        %282 = vmatprep.subr.mxu0 0.0
        %283 = vmatpush1.msra.mxu0 0.0
        %284 = vmatprep.subr.mxu0 0.0
        %285 = vmatpush1.msra.mxu0 0.0
        %286 = vmatprep.subr.mxu0 0.0
        %287 = vmatpush1.msra.mxu0 0.0
        %288 = vmatprep.subr.mxu0 0.0
        %289 = vmatpush1.msra.mxu0 0.0
        %290 = vmatprep.subr.mxu0 0.0
        %291 = vmatpush1.msra.mxu0 0.0
        %292 = vmatprep.subr.mxu0 0.0
        %293 = vmatpush1.msra.mxu0 0.0
        %294 = vmatprep.subr.mxu0 0.0
        %295 = vmatpush1.msra.mxu0 0.0
        %296 = vmatprep.subr.mxu0 0.0
        %297 = vmatpush1.msra.mxu0 0.0
        %298 = vmatprep.subr.mxu0 0.0
        %299 = vmatpush1.msra.mxu0 0.0
        %300 = vmatprep.subr.mxu0 0.0
        %301 = vmatpush1.msra.mxu0 0.0
        %302 = vmatprep.subr.mxu0 0.0
        %303 = vmatpush1.msra.mxu0 0.0
        %304 = vmatprep.subr.mxu0 0.0
        %305 = vmatpush1.msra.mxu0 0.0
        %306 = vmatprep.subr.mxu0 0.0
        %307 = vmatpush1.msra.mxu0 0.0
        %308 = vmatprep.subr.mxu0 0.0
        %309 = vmatpush1.msra.mxu0 0.0
        %310 = vmatprep.subr.mxu0 0.0
        %311 = vmatpush1.msra.mxu0 0.0
        %312 = vmatprep.subr.mxu0 0.0
        %313 = vmatpush1.msra.mxu0 0.0
        %314 = vmatprep.subr.mxu0 0.0
        %315 = vmatpush1.msra.mxu0 0.0
        %316 = vmatprep.subr.mxu0 0.0
        %317 = vmatpush1.msra.mxu0 0.0
        %318 = vmatprep.subr.mxu0 0.0
        %319 = vmatpush1.msra.mxu0 0.0
        %320 = vmatprep.subr.mxu0 0.0
        %321 = vmatpush1.msra.mxu0 0.0
        %322 = vmatprep.subr.mxu0 0.0
        %323 = vmatpush1.msra.mxu0 0.0
        %324 = vmatprep.subr.mxu0 0.0
        %325 = vmatpush1.msra.mxu0 0.0
        %326 = vmatprep.subr.mxu0 0.0
        %327 = vmatpush1.msra.mxu0 0.0
        %328 = vmatprep.mubr.f32.mxu0 0.0
        %329 = vmatmul.mubr.f32.gmra.mrb[0].mxu0 %v262
        %v330 = vpop.f32.mrb[0].mxu0
        %v331 = vadd.f32 %v258, %v330
        %v332 = vpop.f32.mrb[0].mxu0
        %333 = vdwg.mxu0
        %334 = vst.msk [vmem:[%s244] sm:$0xff] %vm260, %v331
        %s335 = sand.u32 %s132, 1
        %s336 = scalar_lea.sflag [#allocation4], %s335
        %s337 = sand.u32 %s132, 1
        %s338 = smul.addr %s337, 8
        %s339 = scalar_lea.vmem [#allocation7], %s338
        // Predicated region
        $region41: #{tpu_custom_call.1} parent=31 // pred_check
          %p340 = pneg %p142
        $region42: #{tpu_custom_call.1} parent=31 // pred_check_branch
          %342 = sbr.rel (%p340) target = $region44
        $region43: #{tpu_custom_call.1} parent=31 // pred_region
          %s344 = ssub.s32 128, 128
          %345 = vsyncadd %s336, %s344
          %s346 = sadd.s32 %s28, %s27
          %s347 = sadd.s32 %s346, %s26
          %s348 = smul.addr %s347, 128
          %s349 = scalar_lea.hbm %s3, %s348
          %s351 = sshll.u32 %s339, 4
          %s352 = int_to_ptr.vmem [resolvable:$true] %s351
          %354 = dma.vmem_to_hbm [thread:$0]  %s352, 128, %s349, %s336
        $region44: #{tpu_custom_call.1} parent=31 // pred_fallthru
          _
      $region32: #{tpu_custom_call.1} parent=5 // pred_fallthru
        _
      %p355 = scmp.le.s32.totalorder 2, %s16
      // Predicated region
      $region45: #{tpu_custom_call.1} parent=5 // pred_check
        %p356 = pneg %p355
      $region46: #{tpu_custom_call.1} parent=5 // pred_check_branch
        %358 = sbr.rel (%p356) target = $region48
      $region47: #{tpu_custom_call.1} parent=5 // pred_region
        %s359 = ssub.s32 %s16, 2
        // Predicated region
        $region49: #{tpu_custom_call.1} parent=47 // pred_check
          %p360 = pneg %p148
        $region50: #{tpu_custom_call.1} parent=47 // pred_check_branch
          %362 = sbr.rel (%p360) target = $region52
        $region51: #{tpu_custom_call.1} parent=47 // pred_region
          %s363 = sand.u32 %s133, 1
          %s364 = scalar_lea.sflag [#allocation4], %s363
          %s365 = sand.u32 %s133, 1
          %s366 = smul.addr %s365, 8
          %s367 = scalar_lea.vmem [#allocation7], %s366
          %368 = dma.done %s364, 128
        $region52: #{tpu_custom_call.1} parent=47 // pred_fallthru
          _
      $region48: #{tpu_custom_call.1} parent=5 // pred_fallthru
        _
    $region6: #{tpu_custom_call.1} parent=1 // loop_footer
      %s20 = sadd.s32 1, %s16
    $region7: #{tpu_custom_call.1} parent=1 // loop_footer_branch
      %15 = sbr.rel target = $region3
    $region8: #{tpu_custom_call.1} parent=1 // loop_exit
      _
    %369 = vsyncpa [#allocation3], 1
    %s370 = scalar_lea.sflag [#allocation3], 1
    %371 = vsyncpa %s370, 1
    %372 = vsyncpa [#allocation6], 1
    %373 = vsyncpa [#allocation4], 1
    %s374 = scalar_lea.sflag [#allocation4], 1
    %375 = vsyncpa %s374, 1

</llo_original>
